<compile_context>
chip_gen: v7x
topology: tpu7x:2x2x1
jax: 0.10.0
libtpu: 0.0.40
codegen_flags: <defaults>
</compile_context>

<pallas_src>
import functools

import jax
import jax.numpy as jnp
from jax import lax
from jax.experimental import pallas as pl
from jax.experimental.pallas import tpu as pltpu


def _onehot_ce_rowloss_kernel(x_ref, t_ref, rowloss_ref, *,
                              block_rows, num_valid_rows):
    """Per-row soft-target cross-entropy for one (TN, C) tile.

    rowloss[r] = logsumexp(x[r]) * sum_c t[r,c] - sum_c (x[r,c] - max_r) * t[r,c]
               = sum_c -log_softmax(x)[r,c] * t[r,c]
    """
    x = x_ref[...].astype(jnp.float32)                            # (TN, C)
    t = t_ref[...].astype(jnp.float32)                            # (TN, C)

    # Numerically-stable logsumexp along the class (lane) axis.
    m = jnp.max(x, axis=1, keepdims=True)                         # (TN, 1)
    s = x - m
    lse = jnp.log(jnp.sum(jnp.exp(s), axis=1, keepdims=True))     # (TN, 1)

    t_sum = jnp.sum(t, axis=1, keepdims=True)                     # (TN, 1)
    st_sum = jnp.sum(s * t, axis=1, keepdims=True)                # (TN, 1)
    rowloss = lse * t_sum - st_sum                                # (TN, 1)

    if num_valid_rows is not None:
        # Ragged last tile: rows past the true batch size read unspecified
        # data from the partially-out-of-bounds input block; zero them out.
        base = pl.program_id(0) * block_rows
        row_idx = base + lax.broadcasted_iota(jnp.int32, rowloss.shape, 0)
        rowloss = jnp.where(row_idx < num_valid_rows, rowloss, 0.0)

    rowloss_ref[...] = rowloss


def _round_up(x: int, m: int) -> int:
    return (x + m - 1) // m * m


def _pick_block_rows(C: int, in_itemsize: int, tgt_itemsize: int) -> int:
    # Keep the double-buffered input tiles comfortably inside the scoped-VMEM
    # budget (we also request 32 MiB explicitly), leaving headroom for the
    # f32 temporaries inside the kernel body.
    budget = 8 * 1024 * 1024
    bytes_per_row = 2 * C * (in_itemsize + tgt_itemsize)  # 2 pipeline buffers
    tn = budget // max(bytes_per_row, 1)
    tn = max(8, min(512, int(tn)))
    return (tn // 8) * 8


def one_hot_cross_entropy(inputs: jax.Array, targets: jax.Array,
                          *, block_rows: int | None = None) -> jax.Array:
    """inputs, targets: (N, C). Returns scalar f32 loss."""
    assert inputs.shape == targets.shape and inputs.ndim == 2
    N, C = inputs.shape

    if block_rows is None:
        block_rows = _pick_block_rows(C, inputs.dtype.itemsize,
                                      targets.dtype.itemsize)

    if N >= 8:
        # Tile rows; no HBM-side padding copy.  Any ragged tail is masked
        # inside the kernel.
        tn = min(block_rows, (N // 8) * 8)
    else:
        # Tiny batch: pad up to one minimum-size (8-row) tile.  Zero-padded
        # rows contribute exactly zero loss (lse*0 - 0).
        tn = 8
        pad = tn - N
        inputs = jnp.pad(inputs, ((0, pad), (0, 0)))
        targets = jnp.pad(targets, ((0, pad), (0, 0)))

    num_tiles = -(-inputs.shape[0] // tn)
    n_pad = num_tiles * tn
    needs_mask = (inputs.shape[0] % tn) != 0

    kernel = functools.partial(
        _onehot_ce_rowloss_kernel,
        block_rows=tn,
        num_valid_rows=(N if needs_mask else None),
    )

    row_loss = pl.pallas_call(
        kernel,
        out_shape=jax.ShapeDtypeStruct((n_pad, 1), jnp.float32),
        grid_spec=pltpu.PrefetchScalarGridSpec(
            num_scalar_prefetch=0,
            grid=(num_tiles,),
            in_specs=[
                pl.BlockSpec((tn, C), lambda i: (i, 0)),
                pl.BlockSpec((tn, C), lambda i: (i, 0)),
            ],
            out_specs=pl.BlockSpec((tn, 1), lambda i: (i, 0)),
        ),
        compiler_params=pltpu.CompilerParams(
            dimension_semantics=("parallel",),
            vmem_limit_bytes=32 * 1024 * 1024,
        ),
    )(inputs, targets)

    # Final reduction in f32; divide by the *global* (un-padded) batch size.
    return jnp.sum(row_loss) / jnp.float32(N)


def _reference(inputs, targets):
    logp = jax.nn.log_softmax(inputs.astype(jnp.float32), axis=1)
    return jnp.sum(-logp * targets.astype(jnp.float32)) / targets.shape[0]


if __name__ == "__main__":
    key = jax.random.PRNGKey(0)
    k1, k2, k3, k4 = jax.random.split(key, 4)

    # Case 1: even batch, hard one-hot targets.
    N, C = 8, 32
    inputs = jax.random.normal(k1, (N, C), dtype=jnp.float32)
    labels = jax.random.randint(k2, (N,), 0, C)
    targets = jax.nn.one_hot(labels, C, dtype=jnp.float32)

    loss = jax.block_until_ready(one_hot_cross_entropy(inputs, targets))
    ref = jax.block_until_ready(_reference(inputs, targets))
    assert jnp.allclose(loss, ref, rtol=1e-5, atol=1e-5), (loss, ref)

    # Case 2: ragged batch (exercises the in-kernel mask path), soft
    # mixup-style targets.
    N2, C2 = 10, 32
    inputs2 = jax.random.normal(k3, (N2, C2), dtype=jnp.float32)
    soft = jax.nn.softmax(jax.random.normal(k4, (N2, C2), dtype=jnp.float32),
                          axis=1)
    loss2 = jax.block_until_ready(one_hot_cross_entropy(inputs2, soft))
    ref2 = jax.block_until_ready(_reference(inputs2, soft))
    assert jnp.allclose(loss2, ref2, rtol=1e-5, atol=1e-5), (loss2, ref2)

    print("KERNEL_OK")
</pallas_src>

<mosaic_0001>
module attributes {stable_mosaic.version = 11 : i64} {
  func.func @_onehot_ce_rowloss_kernel(%arg0: i32, %arg1: memref<8x32xf32, #tpu.memory_space<vmem>>, %arg2: memref<8x32xf32, #tpu.memory_space<vmem>>, %arg3: memref<8x1xf32, #tpu.memory_space<vmem>>) attributes {dimension_semantics = [#tpu.dimension_semantics<parallel>], iteration_bounds = array<i64: 1>, scalar_prefetch = 0 : i64, scratch_operands = 0 : i64, tpu.core_type = #tpu.core_type<tc>, window_params = [{transform_indices = @transform_0, window_bounds = array<i64: 8, 32>}, {transform_indices = @transform_1, window_bounds = array<i64: 8, 32>}, {transform_indices = @transform_2, window_bounds = array<i64: 8, 1>}]} {
    %c0 = arith.constant 0 : index
    %c0_0 = arith.constant 0 : index
    %0 = vector.load %arg1[%c0, %c0_0] : memref<8x32xf32, #tpu.memory_space<vmem>>, vector<8x32xf32>
    %c0_1 = arith.constant 0 : index
    %c0_2 = arith.constant 0 : index
    %1 = vector.load %arg2[%c0_1, %c0_2] : memref<8x32xf32, #tpu.memory_space<vmem>>, vector<8x32xf32>
    %cst = arith.constant dense<0xFF800000> : vector<8xf32>
    %2 = vector.multi_reduction <maximumf>, %0, %cst [1] : vector<8x32xf32> to vector<8xf32>
    %3 = vector.shape_cast %2 : vector<8xf32> to vector<8x1xf32>
    %4 = vector.broadcast %3 : vector<8x1xf32> to vector<8x32xf32>
    %5 = arith.subf %0, %4 : vector<8x32xf32>
    %6 = math.exp %5 : vector<8x32xf32>
    %cst_3 = arith.constant dense<0.000000e+00> : vector<8xf32>
    %7 = vector.multi_reduction <add>, %6, %cst_3 [1] : vector<8x32xf32> to vector<8xf32>
    %8 = vector.shape_cast %7 : vector<8xf32> to vector<8x1xf32>
    %9 = math.log %8 : vector<8x1xf32>
    %cst_4 = arith.constant dense<0.000000e+00> : vector<8xf32>
    %10 = vector.multi_reduction <add>, %1, %cst_4 [1] : vector<8x32xf32> to vector<8xf32>
    %11 = vector.shape_cast %10 : vector<8xf32> to vector<8x1xf32>
    %12 = arith.mulf %5, %1 : vector<8x32xf32>
    %cst_5 = arith.constant dense<0.000000e+00> : vector<8xf32>
    %13 = vector.multi_reduction <add>, %12, %cst_5 [1] : vector<8x32xf32> to vector<8xf32>
    %14 = vector.shape_cast %13 : vector<8xf32> to vector<8x1xf32>
    %15 = arith.mulf %9, %11 : vector<8x1xf32>
    %16 = arith.subf %15, %14 : vector<8x1xf32>
    %c0_6 = arith.constant 0 : index
    %c0_7 = arith.constant 0 : index
    %17 = vector.load %arg3[%c0_6, %c0_7] : memref<8x1xf32, #tpu.memory_space<vmem>>, vector<8x1xf32>
    tpu.vector_store %arg3[%c0_6, %c0_7], %16 {strides = array<i32>} : memref<8x1xf32, #tpu.memory_space<vmem>>, vector<8x1xf32>,
    return
  }
  func.func @transform_0(%arg0: i32) -> (i32, i32) {
    %c0_i32 = arith.constant 0 : i32
    %c0_i32_0 = arith.constant 0 : i32
    return %arg0, %c0_i32 : i32, i32
  }
  func.func @transform_1(%arg0: i32) -> (i32, i32) {
    %c0_i32 = arith.constant 0 : i32
    %c0_i32_0 = arith.constant 0 : i32
    return %arg0, %c0_i32 : i32, i32
  }
  func.func @transform_2(%arg0: i32) -> (i32, i32) {
    %c0_i32 = arith.constant 0 : i32
    %c0_i32_0 = arith.constant 0 : i32
    return %arg0, %c0_i32 : i32, i32
  }
}

</mosaic_0001>

<llo_original>
// kernel: tpu_custom_call.1
$region0: #{tpu_custom_call.1}
  #allocation0 [shape = 'u32[]', space=smem, size = 0x4, offset = 0x4, fixed_abs, tag = 'smem constant byte address 0x4 - core index']
  #allocation1 [shape = 'u32[144,128]{1,0:T(1,128)}', space=vmem, size = 0x12000, scoped, tag = 'internal scratch']
  %s0 = inlined_call_operand.hbm [shape: f32[8,32], index: 0, kind: input, shape index: {}]
  %s1 = inlined_call_operand.hbm [shape: f32[8,32], index: 1, kind: input, shape index: {}]
  %s2 = inlined_call_operand.vmem [shape: f32[8,1], index: 2, kind: output, shape index: {}]
  %s3 = sld [smem:[#allocation0]]
  $region26: #{tpu_custom_call.1} parent=0
    _
  %s5 = ssub.s32 1, %s3
  %s6 = scalar_select 0, %s5, %s3
  $region1: #{tpu_custom_call.1} parent=0
    #allocation2 [shape = 'u8[4096]{0}', space=vmem, size = 0x1000, scoped, tag = 'input window, operand 0, single buffered']
    #allocation3 [shape = 's32[1]{0}', space=sflag, size = 0x4, scoped, tag = 'scoped memory for tpu_custom_call.1']
    #allocation4 [shape = 'u8[4096]{0}', space=vmem, size = 0x1000, scoped, tag = 'input window, operand 1, single buffered']
    #allocation5 [shape = 's32[1]{0}', space=sflag, size = 0x4, scoped, tag = 'scoped memory for tpu_custom_call.1']
    %7 = vsyncpa [#allocation3], 0
    %8 = vsyncpa [#allocation5], 0
    // Predicated region
    $region2: #{tpu_custom_call.1} parent=1 // pred_check
      _
    $region3: #{tpu_custom_call.1} parent=1 // pred_check_branch
      %10 = sbr.rel (0) target = $region5
    $region4: #{tpu_custom_call.1} parent=1 // pred_region
      %s12 = ssub.s32 128, 128
      %13 = vsyncadd [#allocation3], %s12
      %s15 = sshll.u32 [#allocation2], 4
      %s16 = int_to_ptr.vmem [resolvable:$true] %s15
      %18 = dma.hbm_to_vmem [thread:$0]  %s0, 128, %s16, [#allocation3]
    $region5: #{tpu_custom_call.1} parent=1 // pred_fallthru
      _
    // Predicated region
    $region6: #{tpu_custom_call.1} parent=1 // pred_check
      _
    $region7: #{tpu_custom_call.1} parent=1 // pred_check_branch
      %20 = sbr.rel (0) target = $region9
    $region8: #{tpu_custom_call.1} parent=1 // pred_region
      %s22 = ssub.s32 128, 128
      %23 = vsyncadd [#allocation5], %s22
      %s25 = sshll.u32 [#allocation4], 4
      %s26 = int_to_ptr.vmem [resolvable:$true] %s25
      %28 = dma.hbm_to_vmem [thread:$0]  %s1, 128, %s26, [#allocation5]
    $region9: #{tpu_custom_call.1} parent=1 // pred_fallthru
      _
    // Predicated region
    $region10: #{tpu_custom_call.1} parent=1 // pred_check
      _
    $region11: #{tpu_custom_call.1} parent=1 // pred_check_branch
      %30 = sbr.rel (0) target = $region13
    $region12: #{tpu_custom_call.1} parent=1 // pred_region
      %31 = dma.done [#allocation3], 128
    $region13: #{tpu_custom_call.1} parent=1 // pred_fallthru
      _
    // Predicated region
    $region14: #{tpu_custom_call.1} parent=1 // pred_check
      _
    $region15: #{tpu_custom_call.1} parent=1 // pred_check_branch
      %33 = sbr.rel (0) target = $region17
    $region16: #{tpu_custom_call.1} parent=1 // pred_region
      %34 = dma.done [#allocation5], 128
    $region17: #{tpu_custom_call.1} parent=1 // pred_fallthru
      _
    %v35 = vld [vmem:[#allocation2] sm:$0xff]
    %v36 = vld [vmem:[#allocation4] sm:$0xff]
    %vm37 = vcmask 261120
    %v38 = vsel %vm37, %v35, -inf
    %39 = vmax.xlane.f32.xlu0 %v38
    %v40 = vpop.xlane.xlu0 %39
    %v41 = vsub.f32 %v35, %v40
    %v42 = vmul.f32 %v41, 1.442695
    %v43 = vpow.pop %v42
    %v44 = vsel %vm37, %v43, 0.0
    %45 = vadd.xlane.f32.xlu0 %v44
    %v46 = vpop.xlane.xlu0 %45
    %v47 = vlog2.pop %v46
    %v48 = vmul.f32 %v47, 0.6931472
    %v49 = vsel %vm37, %v36, 0.0
    %50 = vadd.xlane.f32.xlu0 %v49
    %v51 = vpop.xlane.xlu0 %50
    %v52 = vmul.f32 %v41, %v36
    %v53 = vsel %vm37, %v52, 0.0
    %54 = vadd.xlane.f32.xlu0 %v53
    %v55 = vpop.xlane.xlu0 %54
    %v56 = vmul.f32 %v48, %v51
    %v57 = vsub.f32 %v56, %v55
    %vm58 = vcmask 7168
    %59 = vst.msk [vmem:[%s2] sm:$0xff] %vm58, %v57
    // Predicated region
    $region18: #{tpu_custom_call.1} parent=1 // pred_check
      _
    $region19: #{tpu_custom_call.1} parent=1 // pred_check_branch
      %61 = sbr.rel (0) target = $region21
    $region20: #{tpu_custom_call.1} parent=1 // pred_region
      _
    $region21: #{tpu_custom_call.1} parent=1 // pred_fallthru
      _
    // Predicated region
    $region22: #{tpu_custom_call.1} parent=1 // pred_check
      _
    $region23: #{tpu_custom_call.1} parent=1 // pred_check_branch
      %63 = sbr.rel (0) target = $region25
    $region24: #{tpu_custom_call.1} parent=1 // pred_region
      _
    $region25: #{tpu_custom_call.1} parent=1 // pred_fallthru
      _
    %64 = vsyncpa [#allocation3], 1
    %65 = vsyncpa [#allocation5], 1

</llo_original>
